<compile_context>
chip_gen: v5e
topology: v5e:2x2
jax: 0.10.0
libtpu: 0.0.40
codegen_flags: <defaults>
</compile_context>

<pallas_src>
import functools

import jax
import jax.numpy as jnp
from jax.experimental import pallas as pl
from jax.experimental.pallas import tpu as pltpu


def _round_up(n, m):
    return ((n + m - 1) // m) * m


def _pad2(a, rows, cols):
    return jnp.pad(a, ((0, rows - a.shape[0]), (0, cols - a.shape[1])))


def _mlp_kernel(x_ref, w1_ref, b1_ref, w2_ref, b2_ref, o_ref, *, activation):
    # fc1: (TM, D_in) @ (D_in, H) -> f32 accumulate on the MXU, bias add in f32.
    h = jnp.dot(x_ref[...], w1_ref[...], preferred_element_type=jnp.float32)
    h = h + b1_ref[...].astype(jnp.float32)  # broadcast (1, H) over batch

    if activation == "relu":
        h = jnp.maximum(h, 0.0)              # VPU
    elif activation == "tanh":
        h = jnp.tanh(h)                      # EUP transcendental
    elif activation == "logistic":
        h = jax.nn.sigmoid(h)                # EUP transcendental
    else:
        raise ValueError(f"unknown activation: {activation}")

    # fc2: (TM, H) @ (H, D_out) -> f32 accumulate, bias add in f32.
    out = jnp.dot(h.astype(w2_ref.dtype), w2_ref[...],
                  preferred_element_type=jnp.float32)
    out = out + b2_ref[...].astype(jnp.float32)
    o_ref[...] = out.astype(o_ref.dtype)


@functools.partial(jax.jit,
                   static_argnames=("activation", "block_m", "compute_dtype"))
def mlp_forward(x, w1, b1, w2, b2, activation="relu", *,
                block_m=256, compute_dtype=None):
    """x: (B, D_in); w1: (D_in, H); b1: (1, H); w2: (H, D_out); b2: (1, D_out).

    Returns (B, D_out) in x.dtype. compute_dtype (e.g. jnp.bfloat16) controls
    the dtype of the MXU operands; accumulation is always f32.
    """
    B, D_in = x.shape
    H = w1.shape[1]
    D_out = w2.shape[1]
    assert w1.shape[0] == D_in and w2.shape[0] == H
    assert b1.shape == (1, H) and b2.shape == (1, D_out)

    out_dtype = x.dtype
    if compute_dtype is None:
        compute_dtype = x.dtype
    compute_dtype = jnp.dtype(compute_dtype)

    # ---- lane / sublane aligned padded sizes -------------------------------
    d_in_p = _round_up(D_in, 128)
    h_p = _round_up(H, 128)
    d_out_p = _round_up(D_out, 128)
    sub = 16 if compute_dtype == jnp.bfloat16 else 8
    tm = max(sub, min(_round_up(block_m, sub), _round_up(B, sub)))
    b_p = _round_up(B, tm)

    # Zero padding keeps the math exact: padded D_in rows of W1 and padded H
    # rows of W2 are zero, so padded lanes never leak into the real outputs.
    x_p = _pad2(x.astype(compute_dtype), b_p, d_in_p)
    w1_p = _pad2(w1.astype(compute_dtype), d_in_p, h_p)
    w2_p = _pad2(w2.astype(compute_dtype), h_p, d_out_p)
    b1_p = _pad2(b1.astype(jnp.float32), 1, h_p)
    b2_p = _pad2(b2.astype(jnp.float32), 1, d_out_p)

    grid = (pl.cdiv(b_p, tm),)

    # ---- VMEM budget (double-buffered x/out tiles + resident weights) ------
    itm = compute_dtype.itemsize
    out_itm = jnp.dtype(out_dtype).itemsize
    footprint = (2 * tm * d_in_p * itm + 2 * tm * d_out_p * out_itm
                 + 2 * (d_in_p * h_p + h_p * d_out_p) * itm
                 + 2 * (h_p + d_out_p) * 4)
    vmem_limit = int(min(max(2 * footprint, 32 << 20), 96 << 20))

    # ---- scheduling hint ----------------------------------------------------
    flops = 2 * b_p * (d_in_p * h_p + h_p * d_out_p)
    transcendentals = 0 if activation == "relu" else b_p * h_p
    bytes_accessed = (x_p.size * itm + w1_p.size * itm + w2_p.size * itm
                      + b1_p.size * 4 + b2_p.size * 4 + b_p * d_out_p * out_itm)

    kernel = functools.partial(_mlp_kernel, activation=activation)

    out_p = pl.pallas_call(
        kernel,
        out_shape=jax.ShapeDtypeStruct((b_p, d_out_p), out_dtype),
        grid=grid,
        in_specs=[
            pl.BlockSpec((tm, d_in_p), lambda i: (i, 0)),      # x: streamed per tile
            pl.BlockSpec((d_in_p, h_p), lambda i: (0, 0)),     # W1: VMEM-resident
            pl.BlockSpec((1, h_p), lambda i: (0, 0)),          # b1: VMEM-resident
            pl.BlockSpec((h_p, d_out_p), lambda i: (0, 0)),    # W2: VMEM-resident
            pl.BlockSpec((1, d_out_p), lambda i: (0, 0)),      # b2: VMEM-resident
        ],
        out_specs=pl.BlockSpec((tm, d_out_p), lambda i: (i, 0)),
        compiler_params=pltpu.CompilerParams(
            dimension_semantics=("parallel",),
            vmem_limit_bytes=vmem_limit,
        ),
        cost_estimate=pl.CostEstimate(
            flops=flops,
            transcendentals=transcendentals,
            bytes_accessed=bytes_accessed,
        ),
    )(x_p, w1_p, b1_p, w2_p, b2_p)

    return out_p[:B, :D_out]


def init_mlp_params(key, input_size, hidden_size, output_size, dtype=jnp.float32):
    """Deterministic init mimicking nn.Linear's U(-1/sqrt(fan_in), 1/sqrt(fan_in)).

    Weights are returned pre-transposed: (in_features, out_features).
    """
    k1, k2, k3, k4 = jax.random.split(key, 4)
    bound1 = 1.0 / jnp.sqrt(input_size)
    bound2 = 1.0 / jnp.sqrt(hidden_size)
    w1 = jax.random.uniform(k1, (input_size, hidden_size), dtype, -bound1, bound1)
    b1 = jax.random.uniform(k2, (1, hidden_size), dtype, -bound1, bound1)
    w2 = jax.random.uniform(k3, (hidden_size, output_size), dtype, -bound2, bound2)
    b2 = jax.random.uniform(k4, (1, output_size), dtype, -bound2, bound2)
    return w1, b1, w2, b2


def _ref_forward(x, w1, b1, w2, b2, activation):
    h = x @ w1 + b1
    if activation == "relu":
        h = jnp.maximum(h, 0.0)
    elif activation == "tanh":
        h = jnp.tanh(h)
    elif activation == "logistic":
        h = jax.nn.sigmoid(h)
    return h @ w2 + b2


if __name__ == "__main__":
    key = jax.random.PRNGKey(0)
    kx, kp, kx2 = jax.random.split(key, 3)

    batch = 8
    input_size = 16
    hidden_size = 32
    output_size = 8

    x = jax.random.normal(kx, (batch, input_size), jnp.float32)
    w1, b1, w2, b2 = init_mlp_params(kp, input_size, hidden_size, output_size)

    # 1) f32 path, relu — tight tolerance vs pure-JAX reference.
    out = mlp_forward(x, w1, b1, w2, b2, activation="relu")
    out = jax.block_until_ready(out)
    ref = _ref_forward(x, w1, b1, w2, b2, "relu")
    assert out.shape == (batch, output_size)
    assert jnp.allclose(out, ref, atol=1e-5, rtol=1e-5)

    # 2) f32 path, tanh, non-multiple-of-8 batch (exercises wrapper padding).
    x2 = jax.random.normal(kx2, (10, input_size), jnp.float32)
    out2 = jax.block_until_ready(mlp_forward(x2, w1, b1, w2, b2, activation="tanh"))
    ref2 = _ref_forward(x2, w1, b1, w2, b2, "tanh")
    assert out2.shape == (10, output_size)
    assert jnp.allclose(out2, ref2, atol=1e-5, rtol=1e-5)

    # 3) bf16 MXU operands (f32 accumulation) — looser tolerance, logistic act.
    out3 = jax.block_until_ready(
        mlp_forward(x, w1, b1, w2, b2, activation="logistic",
                    compute_dtype=jnp.bfloat16))
    ref3 = _ref_forward(x, w1, b1, w2, b2, "logistic")
    assert out3.shape == (batch, output_size)
    assert jnp.allclose(out3, ref3, atol=1e-1, rtol=1e-1)

    print("KERNEL_OK")
</pallas_src>

<mosaic_0001>
module attributes {stable_mosaic.version = 11 : i64} {
  func.func @_mlp_kernel(%arg0: i32, %arg1: memref<8x128xf32, #tpu.memory_space<vmem>>, %arg2: memref<128x128xf32, #tpu.memory_space<vmem>>, %arg3: memref<1x128xf32, #tpu.memory_space<vmem>>, %arg4: memref<128x128xf32, #tpu.memory_space<vmem>>, %arg5: memref<1x128xf32, #tpu.memory_space<vmem>>, %arg6: memref<8x128xf32, #tpu.memory_space<vmem>>) attributes {dimension_semantics = [#tpu.dimension_semantics<parallel>], iteration_bounds = array<i64: 1>, scalar_prefetch = 0 : i64, scratch_operands = 0 : i64, tpu.core_type = #tpu.core_type<tc>, window_params = [{transform_indices = @transform_0, window_bounds = array<i64: 8, 128>}, {pipeline_mode = #tpu.pipeline_mode<synchronous>, transform_indices = @transform_1, window_bounds = array<i64: 128, 128>}, {pipeline_mode = #tpu.pipeline_mode<synchronous>, transform_indices = @transform_2, window_bounds = array<i64: 1, 128>}, {pipeline_mode = #tpu.pipeline_mode<synchronous>, transform_indices = @transform_3, window_bounds = array<i64: 128, 128>}, {pipeline_mode = #tpu.pipeline_mode<synchronous>, transform_indices = @transform_4, window_bounds = array<i64: 1, 128>}, {transform_indices = @transform_5, window_bounds = array<i64: 8, 128>}]} {
    %c0 = arith.constant 0 : index
    %c0_0 = arith.constant 0 : index
    %0 = vector.load %arg1[%c0, %c0_0] : memref<8x128xf32, #tpu.memory_space<vmem>>, vector<8x128xf32>
    %c0_1 = arith.constant 0 : index
    %c0_2 = arith.constant 0 : index
    %1 = vector.load %arg2[%c0_1, %c0_2] : memref<128x128xf32, #tpu.memory_space<vmem>>, vector<128x128xf32>
    %cst = arith.constant dense<0.000000e+00> : vector<8x128xf32>
    %2 = tpu.matmul %0, %1, %cst {dimension_numbers = #tpu.dot_dimension_numbers<[1], [0], [0], [1], [0, 0, 1, 1], [], []>} : vector<8x128xf32>, vector<128x128xf32>, vector<8x128xf32> -> vector<8x128xf32>
    %c0_3 = arith.constant 0 : index
    %c0_4 = arith.constant 0 : index
    %3 = vector.load %arg3[%c0_3, %c0_4] : memref<1x128xf32, #tpu.memory_space<vmem>>, vector<1x128xf32>
    %4 = vector.broadcast %3 : vector<1x128xf32> to vector<8x128xf32>
    %5 = arith.addf %2, %4 : vector<8x128xf32>
    %cst_5 = arith.constant 0.000000e+00 : f32
    %6 = vector.broadcast %cst_5 : f32 to vector<8x128xf32>
    %7 = arith.maximumf %5, %6 : vector<8x128xf32>
    %c0_6 = arith.constant 0 : index
    %c0_7 = arith.constant 0 : index
    %8 = vector.load %arg4[%c0_6, %c0_7] : memref<128x128xf32, #tpu.memory_space<vmem>>, vector<128x128xf32>
    %cst_8 = arith.constant dense<0.000000e+00> : vector<8x128xf32>
    %9 = tpu.matmul %7, %8, %cst_8 {dimension_numbers = #tpu.dot_dimension_numbers<[1], [0], [0], [1], [0, 0, 1, 1], [], []>} : vector<8x128xf32>, vector<128x128xf32>, vector<8x128xf32> -> vector<8x128xf32>
    %c0_9 = arith.constant 0 : index
    %c0_10 = arith.constant 0 : index
    %10 = vector.load %arg5[%c0_9, %c0_10] : memref<1x128xf32, #tpu.memory_space<vmem>>, vector<1x128xf32>
    %11 = vector.broadcast %10 : vector<1x128xf32> to vector<8x128xf32>
    %12 = arith.addf %9, %11 : vector<8x128xf32>
    %c0_11 = arith.constant 0 : index
    %c0_12 = arith.constant 0 : index
    %13 = vector.load %arg6[%c0_11, %c0_12] : memref<8x128xf32, #tpu.memory_space<vmem>>, vector<8x128xf32>
    tpu.vector_store %arg6[%c0_11, %c0_12], %12 {strides = array<i32>} : memref<8x128xf32, #tpu.memory_space<vmem>>, vector<8x128xf32>,
    return
  }
  func.func @transform_0(%arg0: i32) -> (i32, i32) {
    %c0_i32 = arith.constant 0 : i32
    %c0_i32_0 = arith.constant 0 : i32
    return %arg0, %c0_i32 : i32, i32
  }
  func.func @transform_1(%arg0: i32) -> (i32, i32) {
    %c0_i32 = arith.constant 0 : i32
    %c0_i32_0 = arith.constant 0 : i32
    %c0_i32_1 = arith.constant 0 : i32
    return %c0_i32, %c0_i32_0 : i32, i32
  }
  func.func @transform_2(%arg0: i32) -> (i32, i32) {
    %c0_i32 = arith.constant 0 : i32
    %c0_i32_0 = arith.constant 0 : i32
    %c0_i32_1 = arith.constant 0 : i32
    return %c0_i32, %c0_i32_0 : i32, i32
  }
  func.func @transform_3(%arg0: i32) -> (i32, i32) {
    %c0_i32 = arith.constant 0 : i32
    %c0_i32_0 = arith.constant 0 : i32
    %c0_i32_1 = arith.constant 0 : i32
    return %c0_i32, %c0_i32_0 : i32, i32
  }
  func.func @transform_4(%arg0: i32) -> (i32, i32) {
    %c0_i32 = arith.constant 0 : i32
    %c0_i32_0 = arith.constant 0 : i32
    %c0_i32_1 = arith.constant 0 : i32
    return %c0_i32, %c0_i32_0 : i32, i32
  }
  func.func @transform_5(%arg0: i32) -> (i32, i32) {
    %c0_i32 = arith.constant 0 : i32
    %c0_i32_0 = arith.constant 0 : i32
    return %arg0, %c0_i32 : i32, i32
  }
}

</mosaic_0001>

<llo_original>
// kernel: mlp_forward.1
$region0: #{mlp_forward.1}
  #allocation0 [shape = 'u32[]', space=smem, size = 0x4, offset = 0x4, fixed_abs, tag = 'smem constant byte address 0x4 - core index']
  #allocation1 [shape = 'u32[72,128]{1,0:T(1,128)}', space=vmem, size = 0x9000, scoped, tag = 'internal scratch']
  %s0 = inlined_call_operand.vmem [shape: f32[8,128], index: 0, kind: input, shape index: {}]
  %s1 = inlined_call_operand.vmem [shape: f32[128,128], index: 1, kind: input, shape index: {}]
  %s2 = inlined_call_operand.vmem [shape: f32[1,128], index: 2, kind: input, shape index: {}]
  %s3 = inlined_call_operand.vmem [shape: f32[128,128], index: 3, kind: input, shape index: {}]
  %s4 = inlined_call_operand.vmem [shape: f32[1,128], index: 4, kind: input, shape index: {}]
  %s5 = inlined_call_operand.hbm [shape: f32[8,128], index: 5, kind: output, shape index: {}]
  %s6 = sld [smem:[#allocation0]]
  $region30: #{mlp_forward.1} parent=0
    _
  %s8 = ssub.s32 1, %s6
  %s9 = scalar_select 0, %s8, %s6
  $region1: #{mlp_forward.1} parent=0
    #allocation2 [shape = 'u8[4096]{0}', space=vmem, size = 0x1000, scoped, tag = 'output window, operand 0, single buffered']
    #allocation3 [shape = 's32[1]{0}', space=sflag, size = 0x4, scoped, tag = 'scoped memory for mlp_forward.1']
    %10 = vsyncpa [#allocation3], 0
    // Predicated region
    $region2: #{mlp_forward.1} parent=1 // pred_check
      _
    $region3: #{mlp_forward.1} parent=1 // pred_check_branch
      %12 = sbr.rel (0) target = $region5
    $region4: #{mlp_forward.1} parent=1 // pred_region
      _
    $region5: #{mlp_forward.1} parent=1 // pred_fallthru
      _
    // Predicated region
    $region6: #{mlp_forward.1} parent=1 // pred_check
      _
    $region7: #{mlp_forward.1} parent=1 // pred_check_branch
      %14 = sbr.rel (0) target = $region9
    $region8: #{mlp_forward.1} parent=1 // pred_region
      _
    $region9: #{mlp_forward.1} parent=1 // pred_fallthru
      _
    // Predicated region
    $region10: #{mlp_forward.1} parent=1 // pred_check
      _
    $region11: #{mlp_forward.1} parent=1 // pred_check_branch
      %16 = sbr.rel (0) target = $region13
    $region12: #{mlp_forward.1} parent=1 // pred_region
      _
    $region13: #{mlp_forward.1} parent=1 // pred_fallthru
      _
    // Predicated region
    $region14: #{mlp_forward.1} parent=1 // pred_check
      _
    $region15: #{mlp_forward.1} parent=1 // pred_check_branch
      %18 = sbr.rel (0) target = $region17
    $region16: #{mlp_forward.1} parent=1 // pred_region
      _
    $region17: #{mlp_forward.1} parent=1 // pred_fallthru
      _
    // Predicated region
    $region18: #{mlp_forward.1} parent=1 // pred_check
      _
    $region19: #{mlp_forward.1} parent=1 // pred_check_branch
      %20 = sbr.rel (0) target = $region21
    $region20: #{mlp_forward.1} parent=1 // pred_region
      _
    $region21: #{mlp_forward.1} parent=1 // pred_fallthru
      _
    %v21 = vld [vmem:[%s0] sm:$0xff]
    %v22 = vld [vmem:[%s1] sm:$0xff]
    %v23 = vld [vmem:[%s1 + $0x8] sm:$0xff]
    %v24 = vld [vmem:[%s1 + $0x10] sm:$0xff]
    %v25 = vld [vmem:[%s1 + $0x18] sm:$0xff]
    %v26 = vld [vmem:[%s1 + $0x20] sm:$0xff]
    %v27 = vld [vmem:[%s1 + $0x28] sm:$0xff]
    %v28 = vld [vmem:[%s1 + $0x30] sm:$0xff]
    %v29 = vld [vmem:[%s1 + $0x38] sm:$0xff]
    %v30 = vld [vmem:[%s1 + $0x40] sm:$0xff]
    %v31 = vld [vmem:[%s1 + $0x48] sm:$0xff]
    %v32 = vld [vmem:[%s1 + $0x50] sm:$0xff]
    %v33 = vld [vmem:[%s1 + $0x58] sm:$0xff]
    %v34 = vld [vmem:[%s1 + $0x60] sm:$0xff]
    %v35 = vld [vmem:[%s1 + $0x68] sm:$0xff]
    %v36 = vld [vmem:[%s1 + $0x70] sm:$0xff]
    %v37 = vld [vmem:[%s1 + $0x78] sm:$0xff]
    %v38 = vld [vmem:[%s2] sm:$0x1]
    %v40 = vperm.slane %v38, 0
    %42 = vmatpush.msra.mxu0 %v37
    %43 = vmatpush.msra.mxu0 %v36
    %44 = vmatpush.msra.mxu0 %v35
    %45 = vmatpush.msra.mxu0 %v34
    %46 = vmatpush.msra.mxu0 %v33
    %47 = vmatpush.msra.mxu0 %v32
    %48 = vmatpush.msra.mxu0 %v31
    %49 = vmatpush.msra.mxu0 %v30
    %50 = vmatpush.msra.mxu0 %v29
    %51 = vmatpush.msra.mxu0 %v28
    %52 = vmatpush.msra.mxu0 %v27
    %53 = vmatpush.msra.mxu0 %v26
    %54 = vmatpush.msra.mxu0 %v25
    %55 = vmatpush.msra.mxu0 %v24
    %56 = vmatpush.msra.mxu0 %v23
    %57 = vmatpush.msra.mxu0 %v22
    %58 = vmatmul.f32.gmra.mxu0 %v21
    %v59 = vpop.f32.mrf.mxu0
    %v60 = vadd.f32 %v40, %v59
    %61 = vdwg.mxu0
    %v62 = vmax.f32 %v60, 0.0
    %v63 = vld [vmem:[%s3] sm:$0xff]
    %v64 = vld [vmem:[%s3 + $0x8] sm:$0xff]
    %v65 = vld [vmem:[%s3 + $0x10] sm:$0xff]
    %v66 = vld [vmem:[%s3 + $0x18] sm:$0xff]
    %v67 = vld [vmem:[%s3 + $0x20] sm:$0xff]
    %v68 = vld [vmem:[%s3 + $0x28] sm:$0xff]
    %v69 = vld [vmem:[%s3 + $0x30] sm:$0xff]
    %v70 = vld [vmem:[%s3 + $0x38] sm:$0xff]
    %v71 = vld [vmem:[%s3 + $0x40] sm:$0xff]
    %v72 = vld [vmem:[%s3 + $0x48] sm:$0xff]
    %v73 = vld [vmem:[%s3 + $0x50] sm:$0xff]
    %v74 = vld [vmem:[%s3 + $0x58] sm:$0xff]
    %v75 = vld [vmem:[%s3 + $0x60] sm:$0xff]
    %v76 = vld [vmem:[%s3 + $0x68] sm:$0xff]
    %v77 = vld [vmem:[%s3 + $0x70] sm:$0xff]
    %v78 = vld [vmem:[%s3 + $0x78] sm:$0xff]
    %v79 = vld [vmem:[%s4] sm:$0x1]
    %v81 = vperm.slane %v79, 0
    %83 = vmatpush.msra.mxu0 %v78
    %84 = vmatpush.msra.mxu0 %v77
    %85 = vmatpush.msra.mxu0 %v76
    %86 = vmatpush.msra.mxu0 %v75
    %87 = vmatpush.msra.mxu0 %v74
    %88 = vmatpush.msra.mxu0 %v73
    %89 = vmatpush.msra.mxu0 %v72
    %90 = vmatpush.msra.mxu0 %v71
    %91 = vmatpush.msra.mxu0 %v70
    %92 = vmatpush.msra.mxu0 %v69
    %93 = vmatpush.msra.mxu0 %v68
    %94 = vmatpush.msra.mxu0 %v67
    %95 = vmatpush.msra.mxu0 %v66
    %96 = vmatpush.msra.mxu0 %v65
    %97 = vmatpush.msra.mxu0 %v64
    %98 = vmatpush.msra.mxu0 %v63
    %99 = vmatmul.f32.gmra.mxu0 %v62
    %v100 = vpop.f32.mrf.mxu0
    %v101 = vadd.f32 %v81, %v100
    %102 = vdwg.mxu0
    %103 = vst [vmem:[#allocation2] sm:$0xff] %v101
    // Predicated region
    $region22: #{mlp_forward.1} parent=1 // pred_check
      _
    $region23: #{mlp_forward.1} parent=1 // pred_check_branch
      %105 = sbr.rel (0) target = $region25
    $region24: #{mlp_forward.1} parent=1 // pred_region
      %107 = vsyncadd [#allocation3], 0
      %s109 = sshll.u32 [#allocation2], 4
      %s110 = int_to_ptr.vmem [resolvable:$true] %s109
      %s111 = sshll.u32 %s5, 4
      %s112 = int_to_ptr.hbm [resolvable:$true] %s111
      %114 = dma.vmem_to_hbm [thread:$0]  %s110, 128, %s112, [#allocation3]
    $region25: #{mlp_forward.1} parent=1 // pred_fallthru
      _
    // Predicated region
    $region26: #{mlp_forward.1} parent=1 // pred_check
      _
    $region27: #{mlp_forward.1} parent=1 // pred_check_branch
      %116 = sbr.rel (0) target = $region29
    $region28: #{mlp_forward.1} parent=1 // pred_region
      %118 = dma.done [#allocation3], 128
    $region29: #{mlp_forward.1} parent=1 // pred_fallthru
      _
    %119 = vsyncpa [#allocation3], 1

</llo_original>
